<compile_context>
chip_gen: v7x
topology: tpu7x:2x2x1
jax: 0.10.0
libtpu: 0.0.40
codegen_flags: <defaults>
</compile_context>

<pallas_src>
import functools

import jax
import jax.numpy as jnp
from jax import lax
from jax.experimental import pallas as pl
from jax.experimental.pallas import tpu as pltpu

block_size = 8          # max sequence length / causal mask size
embedding_count = 128   # C
head_count = 2          # used only for the 1/sqrt(head_count) scale (as in reference!)
head_size = embedding_count // head_count  # 64


def head_kernel(x_ref, w_ref, o_ref, *, B, T, H):
    # x_ref: (B*T, C)  batch-flattened activations
    # w_ref: (C, 3H)   fused [key | query | value] weights (pre-transposed)
    # o_ref: (T, B*H)  lane-dense output; column block b*H:(b+1)*H is batch b
    x = x_ref[...]                                                   # (B*T, C)

    # Single fused QKV projection on the MXU (f32 accumulation).
    qkv = jnp.dot(x, w_ref[...], preferred_element_type=jnp.float32)  # (B*T, 3H)

    scale = jnp.float32(head_count ** (-0.5))

    # Causal (lower-triangular) mask, shared across batch elements.
    row = lax.broadcasted_iota(jnp.int32, (T, T), 0)
    col = lax.broadcasted_iota(jnp.int32, (T, T), 1)
    causal = col <= row

    outs = []
    for b in range(B):  # B is tiny (2): statically unrolled
        rows = slice(b * T, (b + 1) * T)
        kb = qkv[rows, 0 * H:1 * H]                                  # (T, H)
        qb = qkv[rows, 1 * H:2 * H]                                  # (T, H)
        vb = qkv[rows, 2 * H:3 * H]                                  # (T, H)

        # q @ k^T without materializing a transpose: contract on the H dim.
        s = lax.dot_general(
            qb, kb,
            dimension_numbers=(((1,), (1,)), ((), ())),
            preferred_element_type=jnp.float32,
        ) * scale                                                    # (T, T)

        # Causal mask (diagonal always unmasked -> -inf is NaN-safe here).
        s = jnp.where(causal, s, -jnp.inf)

        # Numerically stable softmax along the last axis.
        s = s - jnp.max(s, axis=-1, keepdims=True)
        e = jnp.exp(s)
        p = e * pl.reciprocal(jnp.sum(e, axis=-1, keepdims=True), approx=False)

        # Dropout: identity in eval mode.

        outs.append(jnp.dot(p, vb, preferred_element_type=jnp.float32))  # (T, H)

    # Concatenate the per-batch outputs along lanes -> one unmasked (T, B*H) store.
    o_ref[...] = jnp.concatenate(outs, axis=-1).astype(o_ref.dtype)


@jax.jit
def head_forward(x, wk, wq, wv):
    """x: (B, T, C) f32.  wk/wq/wv: (head_size, C) f32 (PyTorch nn.Linear layout)."""
    B, T, C = x.shape
    H = wk.shape[0]

    # One fused weight: concat in native (H, C) layout, single transpose -> (C, 3H).
    w_qkv = jnp.concatenate([wk, wq, wv], axis=0).T                  # (C, 3H)
    x2d = x.reshape(B * T, C)                                        # free reshape

    kernel = functools.partial(head_kernel, B=B, T=T, H=H)

    out = pl.pallas_call(
        kernel,
        out_shape=jax.ShapeDtypeStruct((T, B * H), jnp.float32),
        grid_spec=pltpu.PrefetchScalarGridSpec(
            num_scalar_prefetch=0,
            grid=(1,),  # single step: no per-batch serial grid overhead
            in_specs=[
                pl.BlockSpec((B * T, C), lambda i: (0, 0)),
                pl.BlockSpec((C, 3 * H), lambda i: (0, 0)),
            ],
            out_specs=pl.BlockSpec((T, B * H), lambda i: (0, 0)),
        ),
        compiler_params=pltpu.CompilerParams(
            dimension_semantics=("arbitrary",)),
    )(x2d, w_qkv)                                                    # (T, B*H)

    # Un-flatten the lane-dense output back to (B, T, H).
    return jnp.transpose(out.reshape(T, B, H), (1, 0, 2))


def reference_forward(x, wk, wq, wv):
    """Pure-JAX reference mirroring the PyTorch module (eval mode)."""
    k = x @ wk.T
    q = x @ wq.T
    v = x @ wv.T
    w = (q @ jnp.swapaxes(k, -2, -1)) * (head_count ** -0.5)
    T = x.shape[1]
    tril = jnp.tril(jnp.ones((T, T), dtype=bool))
    w = jnp.where(tril, w, -jnp.inf)
    w = jax.nn.softmax(w, axis=-1)
    return w @ v


if __name__ == "__main__":
    key = jax.random.PRNGKey(0)
    kx, kk, kq, kv = jax.random.split(key, 4)

    B, T, C, H = 2, block_size, embedding_count, head_size
    x = jax.random.normal(kx, (B, T, C), dtype=jnp.float32)

    # Deterministic parameter init (mimics nn.Linear uniform(-1/sqrt(C), 1/sqrt(C)))
    bound = 1.0 / jnp.sqrt(jnp.float32(C))
    wk = jax.random.uniform(kk, (H, C), minval=-bound, maxval=bound, dtype=jnp.float32)
    wq = jax.random.uniform(kq, (H, C), minval=-bound, maxval=bound, dtype=jnp.float32)
    wv = jax.random.uniform(kv, (H, C), minval=-bound, maxval=bound, dtype=jnp.float32)

    out = head_forward(x, wk, wq, wv)
    out = jax.block_until_ready(out)

    ref = reference_forward(x, wk, wq, wv)
    assert out.shape == (B, T, H), out.shape
    assert jnp.allclose(out, ref, atol=1e-5, rtol=1e-5), float(jnp.max(jnp.abs(out - ref)))

    print("KERNEL_OK")
</pallas_src>

<mosaic_0001>
module attributes {stable_mosaic.version = 11 : i64} {
  func.func @head_kernel(%arg0: i32, %arg1: memref<16x128xf32, #tpu.memory_space<vmem>>, %arg2: memref<128x192xf32, #tpu.memory_space<vmem>>, %arg3: memref<8x128xf32, #tpu.memory_space<vmem>>) attributes {dimension_semantics = [#tpu.dimension_semantics<arbitrary>], iteration_bounds = array<i64: 1>, scalar_prefetch = 0 : i64, scratch_operands = 0 : i64, tpu.core_type = #tpu.core_type<tc>, window_params = [{pipeline_mode = #tpu.pipeline_mode<synchronous>, transform_indices = @transform_0, window_bounds = array<i64: 16, 128>}, {pipeline_mode = #tpu.pipeline_mode<synchronous>, transform_indices = @transform_1, window_bounds = array<i64: 128, 192>}, {pipeline_mode = #tpu.pipeline_mode<synchronous>, transform_indices = @transform_2, window_bounds = array<i64: 8, 128>}]} {
    %c0 = arith.constant 0 : index
    %c0_0 = arith.constant 0 : index
    %0 = vector.load %arg1[%c0, %c0_0] : memref<16x128xf32, #tpu.memory_space<vmem>>, vector<16x128xf32>
    %c0_1 = arith.constant 0 : index
    %c0_2 = arith.constant 0 : index
    %1 = vector.load %arg2[%c0_1, %c0_2] : memref<128x192xf32, #tpu.memory_space<vmem>>, vector<128x192xf32>
    %cst = arith.constant dense<0.000000e+00> : vector<16x192xf32>
    %2 = tpu.matmul %0, %1, %cst {dimension_numbers = #tpu.dot_dimension_numbers<[1], [0], [0], [1], [0, 0, 1, 1], [], []>} : vector<16x128xf32>, vector<128x192xf32>, vector<16x192xf32> -> vector<16x192xf32>
    %3 = tpu.iota {dimensions = array<i32: 0>} : vector<8x8xi32>
    %4 = tpu.iota {dimensions = array<i32: 1>} : vector<8x8xi32>
    %5 = arith.cmpi sle, %4, %3 : vector<8x8xi32>
    %6 = vector.extract_strided_slice %2 {offsets = [0, 0], sizes = [8, 64], strides = [1, 1]} : vector<16x192xf32> to vector<8x64xf32>
    %7 = vector.extract_strided_slice %2 {offsets = [0, 64], sizes = [8, 64], strides = [1, 1]} : vector<16x192xf32> to vector<8x64xf32>
    %8 = vector.extract_strided_slice %2 {offsets = [0, 128], sizes = [8, 64], strides = [1, 1]} : vector<16x192xf32> to vector<8x64xf32>
    %cst_3 = arith.constant dense<0.000000e+00> : vector<8x8xf32>
    %9 = tpu.matmul %7, %6, %cst_3 {dimension_numbers = #tpu.dot_dimension_numbers<[1], [1], [0], [0], [0, 0, 1, 0], [], []>} : vector<8x64xf32>, vector<8x64xf32>, vector<8x8xf32> -> vector<8x8xf32>
    %cst_4 = arith.constant 0.707106769 : f32
    %10 = vector.broadcast %cst_4 : f32 to vector<8x8xf32>
    %11 = arith.mulf %9, %10 : vector<8x8xf32>
    %cst_5 = arith.constant 0xFF800000 : f32
    %12 = vector.broadcast %cst_5 : f32 to vector<8x8xf32>
    %13 = arith.select %5, %11, %12 : vector<8x8xi1>, vector<8x8xf32>
    %cst_6 = arith.constant dense<0xFF800000> : vector<8xf32>
    %14 = vector.multi_reduction <maximumf>, %13, %cst_6 [1] : vector<8x8xf32> to vector<8xf32>
    %15 = vector.shape_cast %14 : vector<8xf32> to vector<8x1xf32>
    %16 = vector.broadcast %15 : vector<8x1xf32> to vector<8x8xf32>
    %17 = arith.subf %13, %16 : vector<8x8xf32>
    %18 = math.exp %17 : vector<8x8xf32>
    %cst_7 = arith.constant dense<0.000000e+00> : vector<8xf32>
    %19 = vector.multi_reduction <add>, %18, %cst_7 [1] : vector<8x8xf32> to vector<8xf32>
    %20 = vector.shape_cast %19 : vector<8xf32> to vector<8x1xf32>
    %21 = tpu.reciprocal %20 : vector<8x1xf32> -> vector<8x1xf32>
    %22 = vector.broadcast %21 : vector<8x1xf32> to vector<8x8xf32>
    %23 = arith.mulf %18, %22 : vector<8x8xf32>
    %cst_8 = arith.constant dense<0.000000e+00> : vector<8x64xf32>
    %24 = tpu.matmul %23, %8, %cst_8 {dimension_numbers = #tpu.dot_dimension_numbers<[1], [0], [0], [1], [0, 0, 1, 1], [], []>} : vector<8x8xf32>, vector<8x64xf32>, vector<8x64xf32> -> vector<8x64xf32>
    %25 = vector.extract_strided_slice %2 {offsets = [8, 0], sizes = [8, 64], strides = [1, 1]} : vector<16x192xf32> to vector<8x64xf32>
    %26 = vector.extract_strided_slice %2 {offsets = [8, 64], sizes = [8, 64], strides = [1, 1]} : vector<16x192xf32> to vector<8x64xf32>
    %27 = vector.extract_strided_slice %2 {offsets = [8, 128], sizes = [8, 64], strides = [1, 1]} : vector<16x192xf32> to vector<8x64xf32>
    %cst_9 = arith.constant dense<0.000000e+00> : vector<8x8xf32>
    %28 = tpu.matmul %26, %25, %cst_9 {dimension_numbers = #tpu.dot_dimension_numbers<[1], [1], [0], [0], [0, 0, 1, 0], [], []>} : vector<8x64xf32>, vector<8x64xf32>, vector<8x8xf32> -> vector<8x8xf32>
    %cst_10 = arith.constant 0.707106769 : f32
    %29 = vector.broadcast %cst_10 : f32 to vector<8x8xf32>
    %30 = arith.mulf %28, %29 : vector<8x8xf32>
    %cst_11 = arith.constant 0xFF800000 : f32
    %31 = vector.broadcast %cst_11 : f32 to vector<8x8xf32>
    %32 = arith.select %5, %30, %31 : vector<8x8xi1>, vector<8x8xf32>
    %cst_12 = arith.constant dense<0xFF800000> : vector<8xf32>
    %33 = vector.multi_reduction <maximumf>, %32, %cst_12 [1] : vector<8x8xf32> to vector<8xf32>
    %34 = vector.shape_cast %33 : vector<8xf32> to vector<8x1xf32>
    %35 = vector.broadcast %34 : vector<8x1xf32> to vector<8x8xf32>
    %36 = arith.subf %32, %35 : vector<8x8xf32>
    %37 = math.exp %36 : vector<8x8xf32>
    %cst_13 = arith.constant dense<0.000000e+00> : vector<8xf32>
    %38 = vector.multi_reduction <add>, %37, %cst_13 [1] : vector<8x8xf32> to vector<8xf32>
    %39 = vector.shape_cast %38 : vector<8xf32> to vector<8x1xf32>
    %40 = tpu.reciprocal %39 : vector<8x1xf32> -> vector<8x1xf32>
    %41 = vector.broadcast %40 : vector<8x1xf32> to vector<8x8xf32>
    %42 = arith.mulf %37, %41 : vector<8x8xf32>
    %cst_14 = arith.constant dense<0.000000e+00> : vector<8x64xf32>
    %43 = tpu.matmul %42, %27, %cst_14 {dimension_numbers = #tpu.dot_dimension_numbers<[1], [0], [0], [1], [0, 0, 1, 1], [], []>} : vector<8x8xf32>, vector<8x64xf32>, vector<8x64xf32> -> vector<8x64xf32>
    %44 = tpu.concatenate %24, %43 in 1 : vector<8x64xf32>, vector<8x64xf32> -> vector<8x128xf32>
    %c0_15 = arith.constant 0 : index
    %c0_16 = arith.constant 0 : index
    %45 = vector.load %arg3[%c0_15, %c0_16] : memref<8x128xf32, #tpu.memory_space<vmem>>, vector<8x128xf32>
    tpu.vector_store %arg3[%c0_15, %c0_16], %44 {strides = array<i32>} : memref<8x128xf32, #tpu.memory_space<vmem>>, vector<8x128xf32>,
    return
  }
  func.func @transform_0(%arg0: i32) -> (i32, i32) {
    %c0_i32 = arith.constant 0 : i32
    %c0_i32_0 = arith.constant 0 : i32
    %c0_i32_1 = arith.constant 0 : i32
    return %c0_i32, %c0_i32_0 : i32, i32
  }
  func.func @transform_1(%arg0: i32) -> (i32, i32) {
    %c0_i32 = arith.constant 0 : i32
    %c0_i32_0 = arith.constant 0 : i32
    %c0_i32_1 = arith.constant 0 : i32
    return %c0_i32, %c0_i32_0 : i32, i32
  }
  func.func @transform_2(%arg0: i32) -> (i32, i32) {
    %c0_i32 = arith.constant 0 : i32
    %c0_i32_0 = arith.constant 0 : i32
    %c0_i32_1 = arith.constant 0 : i32
    return %c0_i32, %c0_i32_0 : i32, i32
  }
}

</mosaic_0001>

<llo_original>
// kernel: head_forward.1
$region0: #{head_forward.1}
  #allocation0 [shape = 'u32[]', space=smem, size = 0x4, offset = 0x4, fixed_abs, tag = 'smem constant byte address 0x4 - core index']
  #allocation1 [shape = 'u32[144,128]{1,0:T(1,128)}', space=vmem, size = 0x12000, scoped, tag = 'internal scratch']
  %s0 = inlined_call_operand.vmem [shape: f32[16,128], index: 0, kind: input, shape index: {}]
  %s1 = inlined_call_operand.vmem [shape: f32[128,192], index: 1, kind: input, shape index: {}]
  %s2 = inlined_call_operand.vmem [shape: f32[8,128], index: 2, kind: output, shape index: {}]
  %s3 = sld [smem:[#allocation0]]
  $region18: #{head_forward.1} parent=0
    _
  %s5 = ssub.s32 1, %s3
  %s6 = scalar_select 0, %s5, %s3
  // Predicated region
  $region2: #{head_forward.1} parent=0 // pred_check
    _
  $region3: #{head_forward.1} parent=0 // pred_check_branch
    %8 = sbr.rel (0) target = $region5
  $region4: #{head_forward.1} parent=0 // pred_region
    _
  $region5: #{head_forward.1} parent=0 // pred_fallthru
    _
  // Predicated region
  $region6: #{head_forward.1} parent=0 // pred_check
    _
  $region7: #{head_forward.1} parent=0 // pred_check_branch
    %10 = sbr.rel (0) target = $region9
  $region8: #{head_forward.1} parent=0 // pred_region
    _
  $region9: #{head_forward.1} parent=0 // pred_fallthru
    _
  %v11 = vld [vmem:[%s0] sm:$0xff]
  %v12 = vld [vmem:[%s0 + $0x8] sm:$0xff]
  %v13 = vld [vmem:[%s1] sm:$0xff]
  %v14 = vld [vmem:[%s1 + $0x8] sm:$0xff]
  %v15 = vld [vmem:[%s1 + $0x10] sm:$0xff]
  %v16 = vld [vmem:[%s1 + $0x18] sm:$0xff]
  %v17 = vld [vmem:[%s1 + $0x20] sm:$0xff]
  %v18 = vld [vmem:[%s1 + $0x28] sm:$0xff]
  %v19 = vld [vmem:[%s1 + $0x30] sm:$0xff]
  %v20 = vld [vmem:[%s1 + $0x38] sm:$0xff]
  %v21 = vld [vmem:[%s1 + $0x40] sm:$0xff]
  %v22 = vld [vmem:[%s1 + $0x48] sm:$0xff]
  %v23 = vld [vmem:[%s1 + $0x50] sm:$0xff]
  %v24 = vld [vmem:[%s1 + $0x58] sm:$0xff]
  %v25 = vld [vmem:[%s1 + $0x60] sm:$0xff]
  %v26 = vld [vmem:[%s1 + $0x68] sm:$0xff]
  %v27 = vld [vmem:[%s1 + $0x70] sm:$0xff]
  %v28 = vld [vmem:[%s1 + $0x78] sm:$0xff]
  %v29 = vld [vmem:[%s1 + $0x80] sm:$0xff]
  %v30 = vld [vmem:[%s1 + $0x88] sm:$0xff]
  %v31 = vld [vmem:[%s1 + $0x90] sm:$0xff]
  %v32 = vld [vmem:[%s1 + $0x98] sm:$0xff]
  %v33 = vld [vmem:[%s1 + $0xa0] sm:$0xff]
  %v34 = vld [vmem:[%s1 + $0xa8] sm:$0xff]
  %v35 = vld [vmem:[%s1 + $0xb0] sm:$0xff]
  %v36 = vld [vmem:[%s1 + $0xb8] sm:$0xff]
  %v37 = vld [vmem:[%s1 + $0xc0] sm:$0xff]
  %v38 = vld [vmem:[%s1 + $0xc8] sm:$0xff]
  %v39 = vld [vmem:[%s1 + $0xd0] sm:$0xff]
  %v40 = vld [vmem:[%s1 + $0xd8] sm:$0xff]
  %v41 = vld [vmem:[%s1 + $0xe0] sm:$0xff]
  %v42 = vld [vmem:[%s1 + $0xe8] sm:$0xff]
  %v43 = vld [vmem:[%s1 + $0xf0] sm:$0xff]
  %v44 = vld [vmem:[%s1 + $0xf8] sm:$0xff]
  %45 = vmatprep.subr.mxu0 %v14
  %46 = vmatpush1.msra.mxu0 %v13
  %47 = vmatprep.subr.mxu0 %v16
  %48 = vmatpush1.msra.mxu0 %v15
  %49 = vmatprep.subr.mxu0 %v18
  %50 = vmatpush1.msra.mxu0 %v17
  %51 = vmatprep.subr.mxu0 %v20
  %52 = vmatpush1.msra.mxu0 %v19
  %53 = vmatprep.subr.mxu0 %v22
  %54 = vmatpush1.msra.mxu0 %v21
  %55 = vmatprep.subr.mxu0 %v24
  %56 = vmatpush1.msra.mxu0 %v23
  %57 = vmatprep.subr.mxu0 %v26
  %58 = vmatpush1.msra.mxu0 %v25
  %59 = vmatprep.subr.mxu0 %v28
  %60 = vmatpush1.msra.mxu0 %v27
  %61 = vmatprep.subr.mxu0 %v30
  %62 = vmatpush1.msra.mxu0 %v29
  %63 = vmatprep.subr.mxu0 %v32
  %64 = vmatpush1.msra.mxu0 %v31
  %65 = vmatprep.subr.mxu0 %v34
  %66 = vmatpush1.msra.mxu0 %v33
  %67 = vmatprep.subr.mxu0 %v36
  %68 = vmatpush1.msra.mxu0 %v35
  %69 = vmatprep.subr.mxu0 %v38
  %70 = vmatpush1.msra.mxu0 %v37
  %71 = vmatprep.subr.mxu0 %v40
  %72 = vmatpush1.msra.mxu0 %v39
  %73 = vmatprep.subr.mxu0 %v42
  %74 = vmatpush1.msra.mxu0 %v41
  %75 = vmatprep.subr.mxu0 %v44
  %76 = vmatpush1.msra.mxu0 %v43
  %77 = vmatprep.subr.mxu0 0.0
  %78 = vmatpush1.msra.mxu0 0.0
  %79 = vmatprep.subr.mxu0 0.0
  %80 = vmatpush1.msra.mxu0 0.0
  %81 = vmatprep.subr.mxu0 0.0
  %82 = vmatpush1.msra.mxu0 0.0
  %83 = vmatprep.subr.mxu0 0.0
  %84 = vmatpush1.msra.mxu0 0.0
  %85 = vmatprep.subr.mxu0 0.0
  %86 = vmatpush1.msra.mxu0 0.0
  %87 = vmatprep.subr.mxu0 0.0
  %88 = vmatpush1.msra.mxu0 0.0
  %89 = vmatprep.subr.mxu0 0.0
  %90 = vmatpush1.msra.mxu0 0.0
  %91 = vmatprep.subr.mxu0 0.0
  %92 = vmatpush1.msra.mxu0 0.0
  %93 = vmatprep.subr.mxu0 0.0
  %94 = vmatpush1.msra.mxu0 0.0
  %95 = vmatprep.subr.mxu0 0.0
  %96 = vmatpush1.msra.mxu0 0.0
  %97 = vmatprep.subr.mxu0 0.0
  %98 = vmatpush1.msra.mxu0 0.0
  %99 = vmatprep.subr.mxu0 0.0
  %100 = vmatpush1.msra.mxu0 0.0
  %101 = vmatprep.subr.mxu0 0.0
  %102 = vmatpush1.msra.mxu0 0.0
  %103 = vmatprep.subr.mxu0 0.0
  %104 = vmatpush1.msra.mxu0 0.0
  %105 = vmatprep.subr.mxu0 0.0
  %106 = vmatpush1.msra.mxu0 0.0
  %107 = vmatprep.subr.mxu0 0.0
  %108 = vmatpush1.msra.mxu0 0.0
  %109 = vmatprep.mubr.f32.mxu0 0.0
  %110 = vmatmul.mubr.f32.gmra.mrb[0].mxu0 %v11
  %v111 = vpop.f32.mrb[0].mxu0
  %v112 = vadd.f32 0.0, %v111
  %v113 = vpop.f32.mrb[0].mxu0
  %v114 = vadd.f32 0.0, %v113
  %115 = vmatprep.mubr.f32.mxu0 0.0
  %116 = vmatmul.mubr.f32.gmra.mrb[0].mxu0 %v12
  %v117 = vpop.f32.mrb[0].mxu0
  %v118 = vadd.f32 0.0, %v117
  %v119 = vpop.f32.mrb[0].mxu0
  %v120 = vadd.f32 0.0, %v119
  %121 = vdwg.mxu0
  %v122 = vlaneseq
  %v123 = vshrl.u32 %v122, 7
  %v124 = vlaneseq
  %v125 = vand.u32 %v124, 127
  %vm126 = vcmp.le.s32.totalorder %v125, %v123
  %128 = vrot.lane.b32.xlu0 %v112, 64
  %v129 = vpop.permute.xlu0 %128
  %vm130 = vcmask 523264
  %v131 = vsel %vm130, %v129, 0
  %v133 = vsel %vm130, %v112, 0
  %135 = vmatprep.subr.mxu0 0.0
  %136 = vmatpush1.xpose.msra.mxu0 %v133
  %137 = vmatprep.subr.mxu0 0.0
  %138 = vmatpush1.xpose.msra.mxu0 0.0
  %139 = vmatprep.subr.mxu0 0.0
  %140 = vmatpush1.xpose.msra.mxu0 0.0
  %141 = vmatprep.subr.mxu0 0.0
  %142 = vmatpush1.xpose.msra.mxu0 0.0
  %143 = vmatprep.subr.mxu0 0.0
  %144 = vmatpush1.xpose.msra.mxu0 0.0
  %145 = vmatprep.subr.mxu0 0.0
  %146 = vmatpush1.xpose.msra.mxu0 0.0
  %147 = vmatprep.subr.mxu0 0.0
  %148 = vmatpush1.xpose.msra.mxu0 0.0
  %149 = vmatprep.subr.mxu0 0.0
  %150 = vmatpush1.xpose.msra.mxu0 0.0
  %151 = vmatprep.subr.mxu0 0.0
  %152 = vmatpush1.xpose.msra.mxu0 0.0
  %153 = vmatprep.subr.mxu0 0.0
  %154 = vmatpush1.xpose.msra.mxu0 0.0
  %155 = vmatprep.subr.mxu0 0.0
  %156 = vmatpush1.xpose.msra.mxu0 0.0
  %157 = vmatprep.subr.mxu0 0.0
  %158 = vmatpush1.xpose.msra.mxu0 0.0
  %159 = vmatprep.subr.mxu0 0.0
  %160 = vmatpush1.xpose.msra.mxu0 0.0
  %161 = vmatprep.subr.mxu0 0.0
  %162 = vmatpush1.xpose.msra.mxu0 0.0
  %163 = vmatprep.subr.mxu0 0.0
  %164 = vmatpush1.xpose.msra.mxu0 0.0
  %165 = vmatprep.subr.mxu0 0.0
  %166 = vmatpush1.xpose.msra.mxu0 0.0
  %167 = vmatprep.subr.mxu0 0.0
  %168 = vmatpush1.xpose.msra.mxu0 0.0
  %169 = vmatprep.subr.mxu0 0.0
  %170 = vmatpush1.xpose.msra.mxu0 0.0
  %171 = vmatprep.subr.mxu0 0.0
  %172 = vmatpush1.xpose.msra.mxu0 0.0
  %173 = vmatprep.subr.mxu0 0.0
  %174 = vmatpush1.xpose.msra.mxu0 0.0
  %175 = vmatprep.subr.mxu0 0.0
  %176 = vmatpush1.xpose.msra.mxu0 0.0
  %177 = vmatprep.subr.mxu0 0.0
  %178 = vmatpush1.xpose.msra.mxu0 0.0
  %179 = vmatprep.subr.mxu0 0.0
  %180 = vmatpush1.xpose.msra.mxu0 0.0
  %181 = vmatprep.subr.mxu0 0.0
  %182 = vmatpush1.xpose.msra.mxu0 0.0
  %183 = vmatprep.subr.mxu0 0.0
  %184 = vmatpush1.xpose.msra.mxu0 0.0
  %185 = vmatprep.subr.mxu0 0.0
  %186 = vmatpush1.xpose.msra.mxu0 0.0
  %187 = vmatprep.subr.mxu0 0.0
  %188 = vmatpush1.xpose.msra.mxu0 0.0
  %189 = vmatprep.subr.mxu0 0.0
  %190 = vmatpush1.xpose.msra.mxu0 0.0
  %191 = vmatprep.subr.mxu0 0.0
  %192 = vmatpush1.xpose.msra.mxu0 0.0
  %193 = vmatprep.subr.mxu0 0.0
  %194 = vmatpush1.xpose.msra.mxu0 0.0
  %195 = vmatprep.subr.mxu0 0.0
  %196 = vmatpush1.xpose.msra.mxu0 0.0
  %197 = vmatprep.subr.mxu0 0.0
  %198 = vmatpush1.xpose.msra.mxu0 0.0
  %199 = vmatprep.mubr.f32.mxu0 0.0
  %200 = vmatmul.mubr.f32.gmra.mrb[0].mxu0 %v131
  %v201 = vpop.f32.mrb[0].mxu0
  %v202 = vadd.f32 0.0, %v201
  %v203 = vpop.f32.mrb[0].mxu0
  %204 = vdwg.mxu0
  %v205 = vmul.f32 %v202, 0.70710677
  %v206 = vsel %vm126, %v205, -inf
  %vm207 = vcmask 64512
  %v208 = vsel %vm207, %v206, -inf
  %209 = vmax.xlane.f32.xlu0 %v208
  %v210 = vpop.xlane.xlu0 %209
  %v211 = vsub.f32 %v206, %v210
  %v212 = vmul.f32 %v211, 1.442695
  %v213 = vpow.pop %v212
  %v214 = vsel %vm207, %v213, 0.0
  %215 = vadd.xlane.f32.xlu0 %v214
  %v216 = vpop.xlane.xlu0 %215
  %v217 = vrcp.pop %v216
  %v218 = vmul.f32 %v213, %v217
  %v220 = vsel %vm207, %v218, 0
  %222 = vmatprep.subr.mxu0 0.0
  %223 = vmatpush1.msra.mxu0 %v114
  %224 = vmatprep.subr.mxu0 0.0
  %225 = vmatpush1.msra.mxu0 0.0
  %226 = vmatprep.subr.mxu0 0.0
  %227 = vmatpush1.msra.mxu0 0.0
  %228 = vmatprep.subr.mxu0 0.0
  %229 = vmatpush1.msra.mxu0 0.0
  %230 = vmatprep.subr.mxu0 0.0
  %231 = vmatpush1.msra.mxu0 0.0
  %232 = vmatprep.subr.mxu0 0.0
  %233 = vmatpush1.msra.mxu0 0.0
  %234 = vmatprep.subr.mxu0 0.0
  %235 = vmatpush1.msra.mxu0 0.0
  %236 = vmatprep.subr.mxu0 0.0
  %237 = vmatpush1.msra.mxu0 0.0
  %238 = vmatprep.subr.mxu0 0.0
  %239 = vmatpush1.msra.mxu0 0.0
  %240 = vmatprep.subr.mxu0 0.0
  %241 = vmatpush1.msra.mxu0 0.0
  %242 = vmatprep.subr.mxu0 0.0
  %243 = vmatpush1.msra.mxu0 0.0
  %244 = vmatprep.subr.mxu0 0.0
  %245 = vmatpush1.msra.mxu0 0.0
  %246 = vmatprep.subr.mxu0 0.0
  %247 = vmatpush1.msra.mxu0 0.0
  %248 = vmatprep.subr.mxu0 0.0
  %249 = vmatpush1.msra.mxu0 0.0
  %250 = vmatprep.subr.mxu0 0.0
  %251 = vmatpush1.msra.mxu0 0.0
  %252 = vmatprep.subr.mxu0 0.0
  %253 = vmatpush1.msra.mxu0 0.0
  %254 = vmatprep.subr.mxu0 0.0
  %255 = vmatpush1.msra.mxu0 0.0
  %256 = vmatprep.subr.mxu0 0.0
  %257 = vmatpush1.msra.mxu0 0.0
  %258 = vmatprep.subr.mxu0 0.0
  %259 = vmatpush1.msra.mxu0 0.0
  %260 = vmatprep.subr.mxu0 0.0
  %261 = vmatpush1.msra.mxu0 0.0
  %262 = vmatprep.subr.mxu0 0.0
  %263 = vmatpush1.msra.mxu0 0.0
  %264 = vmatprep.subr.mxu0 0.0
  %265 = vmatpush1.msra.mxu0 0.0
  %266 = vmatprep.subr.mxu0 0.0
  %267 = vmatpush1.msra.mxu0 0.0
  %268 = vmatprep.subr.mxu0 0.0
  %269 = vmatpush1.msra.mxu0 0.0
  %270 = vmatprep.subr.mxu0 0.0
  %271 = vmatpush1.msra.mxu0 0.0
  %272 = vmatprep.subr.mxu0 0.0
  %273 = vmatpush1.msra.mxu0 0.0
  %274 = vmatprep.subr.mxu0 0.0
  %275 = vmatpush1.msra.mxu0 0.0
  %276 = vmatprep.subr.mxu0 0.0
  %277 = vmatpush1.msra.mxu0 0.0
  %278 = vmatprep.subr.mxu0 0.0
  %279 = vmatpush1.msra.mxu0 0.0
  %280 = vmatprep.subr.mxu0 0.0
  %281 = vmatpush1.msra.mxu0 0.0
  %282 = vmatprep.subr.mxu0 0.0
  %283 = vmatpush1.msra.mxu0 0.0
  %284 = vmatprep.subr.mxu0 0.0
  %285 = vmatpush1.msra.mxu0 0.0
  %286 = vmatprep.mubr.f32.mxu0 0.0
  %287 = vmatmul.mubr.f32.gmra.mrb[0].mxu0 %v220
  %v288 = vpop.f32.mrb[0].mxu0
  %v289 = vadd.f32 0.0, %v288
  %v290 = vpop.f32.mrb[0].mxu0
  %291 = vdwg.mxu0
  %293 = vrot.lane.b32.xlu0 %v118, 64
  %v294 = vpop.permute.xlu0 %293
  %v295 = vsel %vm130, %v294, 0
  %v297 = vsel %vm130, %v118, 0
  %299 = vmatprep.subr.mxu0 0.0
  %300 = vmatpush1.xpose.msra.mxu0 %v297
  %301 = vmatprep.subr.mxu0 0.0
  %302 = vmatpush1.xpose.msra.mxu0 0.0
  %303 = vmatprep.subr.mxu0 0.0
  %304 = vmatpush1.xpose.msra.mxu0 0.0
  %305 = vmatprep.subr.mxu0 0.0
  %306 = vmatpush1.xpose.msra.mxu0 0.0
  %307 = vmatprep.subr.mxu0 0.0
  %308 = vmatpush1.xpose.msra.mxu0 0.0
  %309 = vmatprep.subr.mxu0 0.0
  %310 = vmatpush1.xpose.msra.mxu0 0.0
  %311 = vmatprep.subr.mxu0 0.0
  %312 = vmatpush1.xpose.msra.mxu0 0.0
  %313 = vmatprep.subr.mxu0 0.0
  %314 = vmatpush1.xpose.msra.mxu0 0.0
  %315 = vmatprep.subr.mxu0 0.0
  %316 = vmatpush1.xpose.msra.mxu0 0.0
  %317 = vmatprep.subr.mxu0 0.0
  %318 = vmatpush1.xpose.msra.mxu0 0.0
  %319 = vmatprep.subr.mxu0 0.0
  %320 = vmatpush1.xpose.msra.mxu0 0.0
  %321 = vmatprep.subr.mxu0 0.0
  %322 = vmatpush1.xpose.msra.mxu0 0.0
  %323 = vmatprep.subr.mxu0 0.0
  %324 = vmatpush1.xpose.msra.mxu0 0.0
  %325 = vmatprep.subr.mxu0 0.0
  %326 = vmatpush1.xpose.msra.mxu0 0.0
  %327 = vmatprep.subr.mxu0 0.0
  %328 = vmatpush1.xpose.msra.mxu0 0.0
  %329 = vmatprep.subr.mxu0 0.0
  %330 = vmatpush1.xpose.msra.mxu0 0.0
  %331 = vmatprep.subr.mxu0 0.0
  %332 = vmatpush1.xpose.msra.mxu0 0.0
  %333 = vmatprep.subr.mxu0 0.0
  %334 = vmatpush1.xpose.msra.mxu0 0.0
  %335 = vmatprep.subr.mxu0 0.0
  %336 = vmatpush1.xpose.msra.mxu0 0.0
  %337 = vmatprep.subr.mxu0 0.0
  %338 = vmatpush1.xpose.msra.mxu0 0.0
  %339 = vmatprep.subr.mxu0 0.0
  %340 = vmatpush1.xpose.msra.mxu0 0.0
  %341 = vmatprep.subr.mxu0 0.0
  %342 = vmatpush1.xpose.msra.mxu0 0.0
  %343 = vmatprep.subr.mxu0 0.0
  %344 = vmatpush1.xpose.msra.mxu0 0.0
  %345 = vmatprep.subr.mxu0 0.0
  %346 = vmatpush1.xpose.msra.mxu0 0.0
  %347 = vmatprep.subr.mxu0 0.0
  %348 = vmatpush1.xpose.msra.mxu0 0.0
  %349 = vmatprep.subr.mxu0 0.0
  %350 = vmatpush1.xpose.msra.mxu0 0.0
  %351 = vmatprep.subr.mxu0 0.0
  %352 = vmatpush1.xpose.msra.mxu0 0.0
  %353 = vmatprep.subr.mxu0 0.0
  %354 = vmatpush1.xpose.msra.mxu0 0.0
  %355 = vmatprep.subr.mxu0 0.0
  %356 = vmatpush1.xpose.msra.mxu0 0.0
  %357 = vmatprep.subr.mxu0 0.0
  %358 = vmatpush1.xpose.msra.mxu0 0.0
  %359 = vmatprep.subr.mxu0 0.0
  %360 = vmatpush1.xpose.msra.mxu0 0.0
  %361 = vmatprep.subr.mxu0 0.0
  %362 = vmatpush1.xpose.msra.mxu0 0.0
  %363 = vmatprep.mubr.f32.mxu0 0.0
  %364 = vmatmul.mubr.f32.gmra.mrb[0].mxu0 %v295
  %v365 = vpop.f32.mrb[0].mxu0
  %v366 = vadd.f32 0.0, %v365
  %v367 = vpop.f32.mrb[0].mxu0
  %368 = vdwg.mxu0
  %v369 = vmul.f32 %v366, 0.70710677
  %v370 = vsel %vm126, %v369, -inf
  %v371 = vsel %vm207, %v370, -inf
  %372 = vmax.xlane.f32.xlu0 %v371
  %v373 = vpop.xlane.xlu0 %372
  %v374 = vsub.f32 %v370, %v373
  %v375 = vmul.f32 %v374, 1.442695
  %v376 = vpow.pop %v375
  %v377 = vsel %vm207, %v376, 0.0
  %378 = vadd.xlane.f32.xlu0 %v377
  %v379 = vpop.xlane.xlu0 %378
  %v380 = vrcp.pop %v379
  %v381 = vmul.f32 %v376, %v380
  %v383 = vsel %vm207, %v381, 0
  %385 = vmatprep.subr.mxu0 0.0
  %386 = vmatpush1.msra.mxu0 %v120
  %387 = vmatprep.subr.mxu0 0.0
  %388 = vmatpush1.msra.mxu0 0.0
  %389 = vmatprep.subr.mxu0 0.0
  %390 = vmatpush1.msra.mxu0 0.0
  %391 = vmatprep.subr.mxu0 0.0
  %392 = vmatpush1.msra.mxu0 0.0
  %393 = vmatprep.subr.mxu0 0.0
  %394 = vmatpush1.msra.mxu0 0.0
  %395 = vmatprep.subr.mxu0 0.0
  %396 = vmatpush1.msra.mxu0 0.0
  %397 = vmatprep.subr.mxu0 0.0
  %398 = vmatpush1.msra.mxu0 0.0
  %399 = vmatprep.subr.mxu0 0.0
  %400 = vmatpush1.msra.mxu0 0.0
  %401 = vmatprep.subr.mxu0 0.0
  %402 = vmatpush1.msra.mxu0 0.0
  %403 = vmatprep.subr.mxu0 0.0
  %404 = vmatpush1.msra.mxu0 0.0
  %405 = vmatprep.subr.mxu0 0.0
  %406 = vmatpush1.msra.mxu0 0.0
  %407 = vmatprep.subr.mxu0 0.0
  %408 = vmatpush1.msra.mxu0 0.0
  %409 = vmatprep.subr.mxu0 0.0
  %410 = vmatpush1.msra.mxu0 0.0
  %411 = vmatprep.subr.mxu0 0.0
  %412 = vmatpush1.msra.mxu0 0.0
  %413 = vmatprep.subr.mxu0 0.0
  %414 = vmatpush1.msra.mxu0 0.0
  %415 = vmatprep.subr.mxu0 0.0
  %416 = vmatpush1.msra.mxu0 0.0
  %417 = vmatprep.subr.mxu0 0.0
  %418 = vmatpush1.msra.mxu0 0.0
  %419 = vmatprep.subr.mxu0 0.0
  %420 = vmatpush1.msra.mxu0 0.0
  %421 = vmatprep.subr.mxu0 0.0
  %422 = vmatpush1.msra.mxu0 0.0
  %423 = vmatprep.subr.mxu0 0.0
  %424 = vmatpush1.msra.mxu0 0.0
  %425 = vmatprep.subr.mxu0 0.0
  %426 = vmatpush1.msra.mxu0 0.0
  %427 = vmatprep.subr.mxu0 0.0
  %428 = vmatpush1.msra.mxu0 0.0
  %429 = vmatprep.subr.mxu0 0.0
  %430 = vmatpush1.msra.mxu0 0.0
  %431 = vmatprep.subr.mxu0 0.0
  %432 = vmatpush1.msra.mxu0 0.0
  %433 = vmatprep.subr.mxu0 0.0
  %434 = vmatpush1.msra.mxu0 0.0
  %435 = vmatprep.subr.mxu0 0.0
  %436 = vmatpush1.msra.mxu0 0.0
  %437 = vmatprep.subr.mxu0 0.0
  %438 = vmatpush1.msra.mxu0 0.0
  %439 = vmatprep.subr.mxu0 0.0
  %440 = vmatpush1.msra.mxu0 0.0
  %441 = vmatprep.subr.mxu0 0.0
  %442 = vmatpush1.msra.mxu0 0.0
  %443 = vmatprep.subr.mxu0 0.0
  %444 = vmatpush1.msra.mxu0 0.0
  %445 = vmatprep.subr.mxu0 0.0
  %446 = vmatpush1.msra.mxu0 0.0
  %447 = vmatprep.subr.mxu0 0.0
  %448 = vmatpush1.msra.mxu0 0.0
  %449 = vmatprep.mubr.f32.mxu0 0.0
  %450 = vmatmul.mubr.f32.gmra.mrb[0].mxu0 %v383
  %v451 = vpop.f32.mrb[0].mxu0
  %v452 = vadd.f32 0.0, %v451
  %v453 = vpop.f32.mrb[0].mxu0
  %454 = vdwg.mxu0
  %456 = vrot.lane.b32.xlu0 %v452, 64
  %v457 = vpop.permute.xlu0 %456
  %v459 = vsel %vm130, %v289, %v457
  %460 = vst [vmem:[%s2] sm:$0xff] %v459
  // Predicated region
  $region10: #{head_forward.1} parent=0 // pred_check
    _
  $region11: #{head_forward.1} parent=0 // pred_check_branch
    %462 = sbr.rel (0) target = $region13
  $region12: #{head_forward.1} parent=0 // pred_region
    _
  $region13: #{head_forward.1} parent=0 // pred_fallthru
    _
  // Predicated region
  $region14: #{head_forward.1} parent=0 // pred_check
    _
  $region15: #{head_forward.1} parent=0 // pred_check_branch
    %464 = sbr.rel (0) target = $region17
  $region16: #{head_forward.1} parent=0 // pred_region
    _
  $region17: #{head_forward.1} parent=0 // pred_fallthru
    _

</llo_original>
